<compile_context>
chip_gen: v6e
topology: v6e:2x2x1
jax: 0.10.0
libtpu: 0.0.40
codegen_flags: <defaults>
</compile_context>

<pallas_src>
import functools

import jax
import jax.numpy as jnp
from jax import lax
from jax.experimental import pallas as pl
from jax.experimental.pallas import tpu as pltpu
import numpy as np


def _distmaps_kernel(ptr_ref, ptc_ref, rows_ref, cols_ref, out_ref, *,
                     P, CH, n_chunks, nr2, use_disks):
    """One grid step = one (spatial tile, group).

    ptr_ref, ptc_ref   : SMEM f32 (G*P,) click rows / cols, pre-scaled by
                         spatial_scale (and pre-divided by norm_radius in the
                         non-disk mode); invalid clicks hold a huge sentinel.
    rows_ref, cols_ref : VMEM f32 (TS, L) pixel-coordinate planes for this
                         spatial tile (precomputed in the wrapper; block index
                         depends only on the tile axis, so the block is reused
                         across all groups).
    out_ref            : VMEM f32 (TS, L) output tile (group axis squeezed).
    """
    g = pl.program_id(1)
    base = g * P

    # Hoist the 2P SMEM scalar loads above the chunk / point loops (P static).
    prs = [ptr_ref[base + p] for p in range(P)]
    pcs = [ptc_ref[base + p] for p in range(P)]

    def do_chunk(off):
        # Register-blocked: (CH, L) rows/cols/acc stay in vregs, not VMEM temps.
        r = rows_ref[pl.ds(off, CH), :]
        c = cols_ref[pl.ds(off, CH), :]
        # Peel p = 0: initialise the accumulator from the first click.
        dr = r - prs[0]
        dc = c - pcs[0]
        acc = dr * dr + dc * dc
        for p in range(1, P):                      # P static & small -> unrolled
            dr = r - prs[p]
            dc = c - pcs[p]
            acc = jnp.minimum(acc, dr * dr + dc * dc)
        if use_disks:
            res = (acc <= jnp.float32(nr2)).astype(jnp.float32)
        else:
            res = jnp.tanh(2.0 * jnp.sqrt(acc))    # sqrt / tanh -> EUP (hidden)
        out_ref[pl.ds(off, CH), :] = res

    if n_chunks == 1:
        do_chunk(0)
    else:
        def body(ci, carry):
            do_chunk(pl.multiple_of(ci * CH, CH))
            return carry
        lax.fori_loop(0, n_chunks, body, 0)


def _choose_spatial_layout(H, W, max_lanes=512):
    """Factor H*W into (S, L) with L a multiple of 128 (dense, unmasked lane
    stores).  L is capped so a register-blocked (8, L) f32 chunk stays a few
    vregs.  Falls back to the natural (H, W) layout when H*W % 128 != 0."""
    N = H * W
    if N % 128 != 0:
        return H, W
    best = 128
    l = 256
    while l <= min(N, max_lanes):
        if N % l == 0 and N // l >= 8:
            best = l
        l += 128
    return N // best, best


def _pick_tile_rows(S, L, target_bytes):
    """Rows per output tile: the largest multiple-of-8 divisor of S whose
    (TS, L) f32 tile stays under target_bytes (block legality requires
    TS % 8 == 0 or TS == S)."""
    max_rows = max(1, target_bytes // (L * 4))
    if S <= max_rows:
        return S
    best = None
    for d in range(8, max_rows + 1, 8):
        if S % d == 0:
            best = d
    return best if best is not None else S


def _pick_chunk_rows(TS, L, target_bytes=16 * 1024):
    """Sublane rows per register-blocked chunk: a multiple of 8 dividing TS,
    sized so a (CH, L) f32 chunk is ~target_bytes (~4 vregs per live array)."""
    if TS % 8 != 0:
        return TS                          # tiny / awkward tiles: single chunk
    max_ch = max(8, (target_bytes // (L * 4)) // 8 * 8)
    if TS <= max_ch:
        return TS
    best = 8
    for ch in range(8, max_ch + 1, 8):
        if TS % ch == 0:
            best = ch
    return best


def distmaps_forward(x, coords, *, norm_radius, spatial_scale=1.0,
                     use_disks=False, tile_target_bytes=1024 * 1024):
    """JAX/Pallas equivalent of DistMaps.forward(x, coords).

    x      : (B, C, H, W)               -- only shapes are used (NCHW)
    coords : (B, 2*num_points, 3) float -- (row, col, order) per click
    returns: (B, 2, H, W) float32 distance maps
    """
    B, _, H, W = x.shape
    P = coords.shape[1] // 2
    if P < 1:
        raise ValueError("DistMaps needs at least one (pos, neg) click pair")
    G = B * 2
    N = H * W
    nr = float(norm_radius) * float(spatial_scale)

    pts = jnp.asarray(coords, jnp.float32).reshape(G * P, 3)
    rc = pts[:, :2]                                      # (G*P, 2) = (row, col)
    invalid = jnp.max(rc, axis=-1) < 0                   # (G*P,)
    rc = rc * jnp.float32(spatial_scale)
    if not use_disks:
        rc = rc / jnp.float32(nr)                        # hoisted out of the kernel
    # Fold invalid clicks into a huge coordinate sentinel: their squared
    # distance to any pixel is >= ~1e12, so they never win the per-pixel min,
    # and tanh / the disk threshold saturate identically to the reference's
    # d2 = 1e6 sentinel (final outputs equal for any practical norm_radius).
    rc = jnp.where(invalid[:, None], jnp.float32(1.0e6), rc)
    pts_r = rc[:, 0]
    pts_c = rc[:, 1]

    S, L = _choose_spatial_layout(H, W)
    TS = _pick_tile_rows(S, L, tile_target_bytes)
    n_tiles = S // TS
    CH = _pick_chunk_rows(TS, L)
    n_chunks = TS // CH

    # Pixel-coordinate planes, computed once per call.  Their BlockSpec index
    # depends only on the spatial-tile grid axis, so the (TS, L) block is
    # fetched once per tile and reused for every group (grid is t-outer).
    idx = jnp.arange(N, dtype=jnp.int32)
    rows = (idx // W).astype(jnp.float32)
    cols = (idx % W).astype(jnp.float32)
    if not use_disks:
        rows = rows / jnp.float32(nr)
        cols = cols / jnp.float32(nr)
    rows = rows.reshape(S, L)
    cols = cols.reshape(S, L)

    kernel = functools.partial(_distmaps_kernel, P=P, CH=CH, n_chunks=n_chunks,
                               nr2=nr * nr, use_disks=use_disks)

    out = pl.pallas_call(
        kernel,
        out_shape=jax.ShapeDtypeStruct((G, S, L), jnp.float32),
        grid=(n_tiles, G),                                       # t outer, g inner
        in_specs=[
            pl.BlockSpec(memory_space=pltpu.MemorySpace.SMEM),   # click rows
            pl.BlockSpec(memory_space=pltpu.MemorySpace.SMEM),   # click cols
            pl.BlockSpec((TS, L), lambda t, g: (t, 0)),          # pixel rows
            pl.BlockSpec((TS, L), lambda t, g: (t, 0)),          # pixel cols
        ],
        out_specs=pl.BlockSpec((None, TS, L), lambda t, g: (g, t, 0)),
        compiler_params=pltpu.CompilerParams(
            dimension_semantics=("parallel", "parallel")),
    )(pts_r, pts_c, rows, cols)

    return out.reshape(B, 2, H, W)


def distmaps_ref(x, coords, *, norm_radius, spatial_scale=1.0, use_disks=False):
    """Pure-JAX reference mirroring the PyTorch code, for verification."""
    B, _, H, W = x.shape
    P = coords.shape[1] // 2
    pts = jnp.asarray(coords, jnp.float32).reshape(-1, 3)
    rc = pts[:, :2]
    invalid = jnp.max(rc, axis=1) < 0
    cr, cc = jnp.meshgrid(jnp.arange(H, dtype=jnp.float32),
                          jnp.arange(W, dtype=jnp.float32), indexing="ij")
    grid = jnp.stack([cr, cc], axis=0)[None]                  # (1, 2, H, W)
    c = grid - (rc * spatial_scale)[:, :, None, None]
    if not use_disks:
        c = c / (norm_radius * spatial_scale)
    c = c * c
    d2 = c[:, 0] + c[:, 1]                                    # (G*P, H, W)
    d2 = jnp.where(invalid[:, None, None], 1000000.0, d2)
    d2 = d2.reshape(-1, P, H, W).min(axis=1).reshape(B, 2, H, W)
    if use_disks:
        return (d2 <= (norm_radius * spatial_scale) ** 2).astype(jnp.float32)
    return jnp.tanh(2.0 * jnp.sqrt(d2))


if __name__ == "__main__":
    key = jax.random.PRNGKey(0)
    # (B, C, H, W, num_points, tile_target_bytes)
    #   16x16   : lane-refactored layout (S=2, L=128), single tile & chunk
    #   12x20   : natural-layout fallback (H*W not a multiple of 128)
    #   128x128 : small tile budget -> multi-tile grid + chunked point loop
    configs = [
        (2, 4, 16, 16, 4, 1024 * 1024),
        (1, 3, 12, 20, 3, 1024 * 1024),
        (1, 2, 128, 128, 2, 32 * 1024),
    ]

    for (B, C, H, W, num_points, tile_bytes) in configs:
        key, kx, kc = jax.random.split(key, 3)
        x = jax.random.normal(kx, (B, C, H, W), dtype=jnp.float32)

        # (row, col) clicks in [0, min(H, W)), plus an "order" channel.
        rc = jax.random.uniform(kc, (B, 2 * num_points, 2),
                                minval=0.0, maxval=float(min(H, W)))
        order = jnp.zeros((B, 2 * num_points, 1), jnp.float32)
        coords = jnp.concatenate([rc, order], axis=-1)
        # Mark some clicks invalid (row = col = -1), as the interactive
        # segmentation pipeline does for missing clicks.
        coords = coords.at[0, num_points + 1, :2].set(-1.0)
        if B > 1:
            coords = coords.at[1, 1, :2].set(-1.0)

        for use_disks in (False, True):
            out = distmaps_forward(x, coords, norm_radius=5.0,
                                   spatial_scale=1.0, use_disks=use_disks,
                                   tile_target_bytes=tile_bytes)
            out = jax.block_until_ready(out)
            ref = distmaps_ref(x, coords, norm_radius=5.0,
                               spatial_scale=1.0, use_disks=use_disks)
            assert out.shape == (B, 2, H, W) and out.dtype == jnp.float32
            np.testing.assert_allclose(np.asarray(out), np.asarray(ref),
                                       atol=1e-4, rtol=1e-4)

    print("KERNEL_OK")
</pallas_src>

<mosaic_0001>
module attributes {stable_mosaic.version = 11 : i64} {
  func.func @_distmaps_kernel(%arg0: i32, %arg1: i32, %arg2: memref<16xf32, #tpu.memory_space<smem>>, %arg3: memref<16xf32, #tpu.memory_space<smem>>, %arg4: memref<2x128xf32, #tpu.memory_space<vmem>>, %arg5: memref<2x128xf32, #tpu.memory_space<vmem>>, %arg6: memref<1x2x128xf32, #tpu.memory_space<vmem>>) attributes {dimension_semantics = [#tpu.dimension_semantics<parallel>, #tpu.dimension_semantics<parallel>], iteration_bounds = array<i64: 1, 4>, scalar_prefetch = 0 : i64, scratch_operands = 0 : i64, tpu.core_type = #tpu.core_type<tc>, window_params = [{transform_indices = @transform_0, window_bounds = array<i64: 16>}, {transform_indices = @transform_1, window_bounds = array<i64: 16>}, {transform_indices = @transform_2, window_bounds = array<i64: 2, 128>}, {transform_indices = @transform_3, window_bounds = array<i64: 2, 128>}, {transform_indices = @transform_4, window_bounds = array<i64: 1, 2, 128>}]} {
    %c4_i32 = arith.constant 4 : i32
    %0 = arith.muli %arg1, %c4_i32 : i32
    %c0_i32 = arith.constant 0 : i32
    %1 = arith.addi %0, %c0_i32 : i32
    %2 = arith.index_cast %1 : i32 to index
    %3 = memref.load %arg2[%2] : memref<16xf32, #tpu.memory_space<smem>>
    %c1_i32 = arith.constant 1 : i32
    %4 = arith.addi %0, %c1_i32 : i32
    %5 = arith.index_cast %4 : i32 to index
    %6 = memref.load %arg2[%5] : memref<16xf32, #tpu.memory_space<smem>>
    %c2_i32 = arith.constant 2 : i32
    %7 = arith.addi %0, %c2_i32 : i32
    %8 = arith.index_cast %7 : i32 to index
    %9 = memref.load %arg2[%8] : memref<16xf32, #tpu.memory_space<smem>>
    %c3_i32 = arith.constant 3 : i32
    %10 = arith.addi %0, %c3_i32 : i32
    %11 = arith.index_cast %10 : i32 to index
    %12 = memref.load %arg2[%11] : memref<16xf32, #tpu.memory_space<smem>>
    %c0_i32_0 = arith.constant 0 : i32
    %13 = arith.addi %0, %c0_i32_0 : i32
    %14 = arith.index_cast %13 : i32 to index
    %15 = memref.load %arg3[%14] : memref<16xf32, #tpu.memory_space<smem>>
    %c1_i32_1 = arith.constant 1 : i32
    %16 = arith.addi %0, %c1_i32_1 : i32
    %17 = arith.index_cast %16 : i32 to index
    %18 = memref.load %arg3[%17] : memref<16xf32, #tpu.memory_space<smem>>
    %c2_i32_2 = arith.constant 2 : i32
    %19 = arith.addi %0, %c2_i32_2 : i32
    %20 = arith.index_cast %19 : i32 to index
    %21 = memref.load %arg3[%20] : memref<16xf32, #tpu.memory_space<smem>>
    %c3_i32_3 = arith.constant 3 : i32
    %22 = arith.addi %0, %c3_i32_3 : i32
    %23 = arith.index_cast %22 : i32 to index
    %24 = memref.load %arg3[%23] : memref<16xf32, #tpu.memory_space<smem>>
    %c0 = arith.constant 0 : index
    %c0_4 = arith.constant 0 : index
    %25 = vector.load %arg4[%c0, %c0_4] : memref<2x128xf32, #tpu.memory_space<vmem>>, vector<2x128xf32>
    %c0_5 = arith.constant 0 : index
    %c0_6 = arith.constant 0 : index
    %26 = vector.load %arg5[%c0_5, %c0_6] : memref<2x128xf32, #tpu.memory_space<vmem>>, vector<2x128xf32>
    %27 = vector.broadcast %3 : f32 to vector<2x128xf32>
    %28 = arith.subf %25, %27 : vector<2x128xf32>
    %29 = vector.broadcast %15 : f32 to vector<2x128xf32>
    %30 = arith.subf %26, %29 : vector<2x128xf32>
    %31 = arith.mulf %28, %28 : vector<2x128xf32>
    %32 = arith.mulf %30, %30 : vector<2x128xf32>
    %33 = arith.addf %31, %32 : vector<2x128xf32>
    %34 = vector.broadcast %6 : f32 to vector<2x128xf32>
    %35 = arith.subf %25, %34 : vector<2x128xf32>
    %36 = vector.broadcast %18 : f32 to vector<2x128xf32>
    %37 = arith.subf %26, %36 : vector<2x128xf32>
    %38 = arith.mulf %35, %35 : vector<2x128xf32>
    %39 = arith.mulf %37, %37 : vector<2x128xf32>
    %40 = arith.addf %38, %39 : vector<2x128xf32>
    %41 = arith.minimumf %33, %40 : vector<2x128xf32>
    %42 = vector.broadcast %9 : f32 to vector<2x128xf32>
    %43 = arith.subf %25, %42 : vector<2x128xf32>
    %44 = vector.broadcast %21 : f32 to vector<2x128xf32>
    %45 = arith.subf %26, %44 : vector<2x128xf32>
    %46 = arith.mulf %43, %43 : vector<2x128xf32>
    %47 = arith.mulf %45, %45 : vector<2x128xf32>
    %48 = arith.addf %46, %47 : vector<2x128xf32>
    %49 = arith.minimumf %41, %48 : vector<2x128xf32>
    %50 = vector.broadcast %12 : f32 to vector<2x128xf32>
    %51 = arith.subf %25, %50 : vector<2x128xf32>
    %52 = vector.broadcast %24 : f32 to vector<2x128xf32>
    %53 = arith.subf %26, %52 : vector<2x128xf32>
    %54 = arith.mulf %51, %51 : vector<2x128xf32>
    %55 = arith.mulf %53, %53 : vector<2x128xf32>
    %56 = arith.addf %54, %55 : vector<2x128xf32>
    %57 = arith.minimumf %49, %56 : vector<2x128xf32>
    %58 = math.sqrt %57 : vector<2x128xf32>
    %cst = arith.constant 2.000000e+00 : f32
    %59 = vector.broadcast %cst : f32 to vector<2x128xf32>
    %60 = arith.mulf %59, %58 : vector<2x128xf32>
    %61 = math.tanh %60 : vector<2x128xf32>
    %c0_7 = arith.constant 0 : index
    %c0_8 = arith.constant 0 : index
    %c0_9 = arith.constant 0 : index
    %62 = vector.load %arg6[%c0_7, %c0_8, %c0_9] : memref<1x2x128xf32, #tpu.memory_space<vmem>>, vector<1x2x128xf32>
    %63 = vector.shape_cast %62 : vector<1x2x128xf32> to vector<2x128xf32>
    %64 = vector.shape_cast %61 : vector<2x128xf32> to vector<1x2x128xf32>
    tpu.vector_store %arg6[%c0_7, %c0_8, %c0_9], %64 {strides = array<i32>} : memref<1x2x128xf32, #tpu.memory_space<vmem>>, vector<1x2x128xf32>,
    return
  }
  func.func @transform_0(%arg0: i32, %arg1: i32) -> i32 {
    %c0_i32 = arith.constant 0 : i32
    %c0_i32_0 = arith.constant 0 : i32
    return %c0_i32 : i32
  }
  func.func @transform_1(%arg0: i32, %arg1: i32) -> i32 {
    %c0_i32 = arith.constant 0 : i32
    %c0_i32_0 = arith.constant 0 : i32
    return %c0_i32 : i32
  }
  func.func @transform_2(%arg0: i32, %arg1: i32) -> (i32, i32) {
    %c0_i32 = arith.constant 0 : i32
    %c0_i32_0 = arith.constant 0 : i32
    return %arg0, %c0_i32 : i32, i32
  }
  func.func @transform_3(%arg0: i32, %arg1: i32) -> (i32, i32) {
    %c0_i32 = arith.constant 0 : i32
    %c0_i32_0 = arith.constant 0 : i32
    return %arg0, %c0_i32 : i32, i32
  }
  func.func @transform_4(%arg0: i32, %arg1: i32) -> (i32, i32, i32) {
    %c0_i32 = arith.constant 0 : i32
    %c0_i32_0 = arith.constant 0 : i32
    return %arg1, %arg0, %c0_i32 : i32, i32, i32
  }
}

</mosaic_0001>

<llo_original>
// kernel: tpu_custom_call.1
$region0: #{tpu_custom_call.1}
  #allocation0 [shape = 'u32[]', space=smem, size = 0x4, offset = 0x4, fixed_abs, tag = 'smem constant byte address 0x4 - core index']
  #allocation1 [shape = 'u32[144,128]{1,0:T(1,128)}', space=vmem, size = 0x12000, scoped, tag = 'internal scratch']
  %s0 = inlined_call_operand.hbm [shape: f32[16], index: 0, kind: input, shape index: {}]
  %s1 = inlined_call_operand.vmem [shape: f32[16], index: 1, kind: input, shape index: {}]
  %s2 = inlined_call_operand.vmem [shape: f32[2,128], index: 2, kind: input, shape index: {}]
  %s3 = inlined_call_operand.vmem [shape: f32[2,128], index: 3, kind: input, shape index: {}]
  %s4 = inlined_call_operand.hbm [shape: f32[4,2,128], index: 4, kind: output, shape index: {}]
  %s5 = sld [smem:[#allocation0]]
  $region57: #{tpu_custom_call.1} parent=0
    _
  %s7 = ssub.s32 1, %s5
  %s8 = scalar_select 0, %s7, %s5
  $region1: #{tpu_custom_call.1} parent=0
    #allocation2 [shape = 'u8[512]{0}', space=smem, size = 0x200, scoped, tag = 'input window, operand 0, single buffered']
    #allocation3 [shape = 's32[2]{0}', space=sflag, size = 0x8, scoped, tag = 'scoped memory for tpu_custom_call.1']
    #allocation4 [shape = 's32[2]{0}', space=sflag, size = 0x8, scoped, tag = 'scoped memory for tpu_custom_call.1']
    #allocation5 [shape = 's32[2]{0}', space=sflag, size = 0x8, scoped, tag = 'scoped memory for tpu_custom_call.1']
    #allocation6 [shape = 'u8[512]{0}', space=smem, size = 0x200, scoped, tag = 'input window, operand 1, single buffered']
    #allocation7 [shape = 'u8[2048]{0}', space=vmem, size = 0x800, scoped, tag = 'output window, operand 0']
    %9 = vsyncpa [#allocation4], 0
    %10 = vsyncpa [#allocation5], 0
    %11 = vsyncpa [#allocation3], 0
    %s12 = scalar_lea.sflag [#allocation3], 1
    %13 = vsyncpa %s12, 0
    loop: start=0, step=1, limit=6
    $region2: #{tpu_custom_call.1} parent=1 // loop_pre_header
      _
    $region3: #{tpu_custom_call.1} parent=1 // loop_header
      %s15 = sphi 0, %s19
      %p16 = scmp.ge.s32.totalorder %s15, 6
      %s22 = sphi 0, %s34
      %s23 = sphi 0, %s30
      %s24 = sphi 0, %s22
      %s25 = sphi 0, %s23
      %s26 = sphi 0, %s24
      %s27 = sphi 0, %s25
      %s35 = sphi 0, %s35
      %s37 = sphi 0, %s35
      %s38 = sphi 0, %s37
      %s52 = sphi 0, %s38
      %s56 = sphi 0, %s56
      %s58 = sphi 0, %s56
      %s59 = sphi 0, %s58
      %s73 = sphi 0, %s59
      %s79 = sphi 0, %s81
      %s82 = sphi 0, %s79
      %s83 = sphi 0, %s82
      %s99 = sphi 0, %s83
      %s105 = sphi 0, %s107
      %s108 = sphi 0, %s105
      %s109 = sphi 0, %s108
      %s125 = sphi 0, %s109
      %s133 = sphi 0, %s135
      %s136 = sphi 0, %s133
      %s137 = sphi 0, %s136
      %s153 = sphi 0, %s137
    $region4: #{tpu_custom_call.1} parent=1 // loop_header_branch
      %18 = sbr.rel (%p16) target = $region8
    $region5: #{tpu_custom_call.1} parent=1 // loop_body
      %s20 = ssub.s32 %s15, 1
      %s21 = ssub.s32 %s15, 2
      %s28 = sadd.s32 1, %s23
      %p29 = scmp.ge.s32.totalorder %s28, 4
      %s30 = scalar_select %p29, 0, %s28
      %s31 = sadd.s32 1, %s22
      %s32 = scalar_select %p29, %s31, %s22
      %p33 = scmp.ge.s32.totalorder %s32, 1
      %s34 = scalar_select %p33, 0, %s32
      %s36 = sadd.s32 %s35, 1
      %p39 = scmp.eq.s32.totalorder %s15, 3
      %p40 = scmp.ne.s32.totalorder %s35, %s37
      %p41 = scmp.eq.s32.totalorder %s15, 0
      %p42 = por %p40, %p41
      %p43 = scmp.ne.s32.totalorder %s35, %s37
      %p44 = scmp.eq.s32.totalorder %s20, 3
      %p45 = por %p43, %p44
      %p46 = scmp.ne.s32.totalorder %s37, %s38
      %p47 = scmp.eq.s32.totalorder %s20, 0
      %p48 = por %p46, %p47
      %p49 = scmp.ne.s32.totalorder %s37, %s38
      %p50 = scmp.eq.s32.totalorder %s21, 3
      %p51 = por %p49, %p50
      %p53 = scmp.ne.s32.totalorder %s38, %s52
      %p54 = scmp.eq.s32.totalorder %s21, 0
      %p55 = por %p53, %p54
      %s57 = sadd.s32 %s56, 1
      %p60 = scmp.eq.s32.totalorder %s15, 3
      %p61 = scmp.ne.s32.totalorder %s56, %s58
      %p62 = scmp.eq.s32.totalorder %s15, 0
      %p63 = por %p61, %p62
      %p64 = scmp.ne.s32.totalorder %s56, %s58
      %p65 = scmp.eq.s32.totalorder %s20, 3
      %p66 = por %p64, %p65
      %p67 = scmp.ne.s32.totalorder %s58, %s59
      %p68 = scmp.eq.s32.totalorder %s20, 0
      %p69 = por %p67, %p68
      %p70 = scmp.ne.s32.totalorder %s58, %s59
      %p71 = scmp.eq.s32.totalorder %s21, 3
      %p72 = por %p70, %p71
      %p74 = scmp.ne.s32.totalorder %s59, %s73
      %p75 = scmp.eq.s32.totalorder %s21, 0
      %p76 = por %p74, %p75
      %s77 = ssub.s32 %s22, %s34
      %p78 = scmp.eq.s32.totalorder %s77, 0
      %s80 = sadd.s32 %s79, 1
      %s81 = scalar_select %p78, %s79, %s80
      %p84 = pneg %p78
      %p85 = scmp.eq.s32.totalorder %s15, 3
      %p86 = por %p84, %p85
      %p87 = scmp.ne.s32.totalorder %s79, %s82
      %p88 = scmp.eq.s32.totalorder %s15, 0
      %p89 = por %p87, %p88
      %p90 = scmp.ne.s32.totalorder %s79, %s82
      %p91 = scmp.eq.s32.totalorder %s20, 3
      %p92 = por %p90, %p91
      %p93 = scmp.ne.s32.totalorder %s82, %s83
      %p94 = scmp.eq.s32.totalorder %s20, 0
      %p95 = por %p93, %p94
      %p96 = scmp.ne.s32.totalorder %s82, %s83
      %p97 = scmp.eq.s32.totalorder %s21, 3
      %p98 = por %p96, %p97
      %p100 = scmp.ne.s32.totalorder %s83, %s99
      %p101 = scmp.eq.s32.totalorder %s21, 0
      %p102 = por %p100, %p101
      %s103 = ssub.s32 %s22, %s34
      %p104 = scmp.eq.s32.totalorder %s103, 0
      %s106 = sadd.s32 %s105, 1
      %s107 = scalar_select %p104, %s105, %s106
      %p110 = pneg %p104
      %p111 = scmp.eq.s32.totalorder %s15, 3
      %p112 = por %p110, %p111
      %p113 = scmp.ne.s32.totalorder %s105, %s108
      %p114 = scmp.eq.s32.totalorder %s15, 0
      %p115 = por %p113, %p114
      %p116 = scmp.ne.s32.totalorder %s105, %s108
      %p117 = scmp.eq.s32.totalorder %s20, 3
      %p118 = por %p116, %p117
      %p119 = scmp.ne.s32.totalorder %s108, %s109
      %p120 = scmp.eq.s32.totalorder %s20, 0
      %p121 = por %p119, %p120
      %p122 = scmp.ne.s32.totalorder %s108, %s109
      %p123 = scmp.eq.s32.totalorder %s21, 3
      %p124 = por %p122, %p123
      %p126 = scmp.ne.s32.totalorder %s109, %s125
      %p127 = scmp.eq.s32.totalorder %s21, 0
      %p128 = por %p126, %p127
      %s129 = ssub.s32 %s23, %s30
      %s130 = ssub.s32 %s22, %s34
      %s131 = sor.u32 %s129, %s130
      %p132 = scmp.eq.s32.totalorder %s131, 0
      %s134 = sadd.s32 %s133, 1
      %s135 = scalar_select %p132, %s133, %s134
      %p138 = pneg %p132
      %p139 = scmp.eq.s32.totalorder %s15, 3
      %p140 = por %p138, %p139
      %p141 = scmp.ne.s32.totalorder %s133, %s136
      %p142 = scmp.eq.s32.totalorder %s15, 0
      %p143 = por %p141, %p142
      %p144 = scmp.ne.s32.totalorder %s133, %s136
      %p145 = scmp.eq.s32.totalorder %s20, 3
      %p146 = por %p144, %p145
      %p147 = scmp.ne.s32.totalorder %s136, %s137
      %p148 = scmp.eq.s32.totalorder %s20, 0
      %p149 = por %p147, %p148
      %p150 = scmp.ne.s32.totalorder %s136, %s137
      %p151 = scmp.eq.s32.totalorder %s21, 3
      %p152 = por %p150, %p151
      %p154 = scmp.ne.s32.totalorder %s137, %s153
      %p155 = scmp.eq.s32.totalorder %s21, 0
      %p156 = por %p154, %p155
      %p157 = scmp.le.s32.totalorder 1, %s15
      %p158 = scmp.lt.s32.totalorder %s15, 5
      %p159 = pnand %p157, %p158
      %p160 = pneg %p159
      // Predicated region
      $region9: #{tpu_custom_call.1} parent=5 // pred_check
        _
      $region10: #{tpu_custom_call.1} parent=5 // pred_check_branch
        %162 = sbr.rel (%p159) target = $region12
      $region11: #{tpu_custom_call.1} parent=5 // pred_region
        %s163 = ssub.s32 %s15, 1
        // Predicated region
        $region13: #{tpu_custom_call.1} parent=11 // pred_check
          %p164 = pneg %p48
        $region14: #{tpu_custom_call.1} parent=11 // pred_check_branch
          %166 = sbr.rel (%p164) target = $region16
        $region15: #{tpu_custom_call.1} parent=11 // pred_region
          %s168 = ssub.s32 16, 16
          %169 = vsyncadd [#allocation4], %s168
          %172 = dma.hbm_to_smem %s0, 16, [#allocation2], [#allocation4]
        $region16: #{tpu_custom_call.1} parent=11 // pred_fallthru
          _
        // Predicated region
        $region17: #{tpu_custom_call.1} parent=11 // pred_check
          %p173 = pneg %p69
        $region18: #{tpu_custom_call.1} parent=11 // pred_check_branch
          %175 = sbr.rel (%p173) target = $region20
        $region19: #{tpu_custom_call.1} parent=11 // pred_region
          %s177 = ssub.s32 16, 16
          %178 = vsyncadd [#allocation5], %s177
          %s180 = sshll.u32 %s1, 4
          %s181 = int_to_ptr.vmem [resolvable:$true] %s180
          %183 = dma.vmem_to_smem %s181, 16, [#allocation6], [#allocation5]
        $region20: #{tpu_custom_call.1} parent=11 // pred_fallthru
          _
        // Predicated region
        $region21: #{tpu_custom_call.1} parent=11 // pred_check
          %p184 = pneg %p95
        $region22: #{tpu_custom_call.1} parent=11 // pred_check_branch
          %186 = sbr.rel (%p184) target = $region24
        $region23: #{tpu_custom_call.1} parent=11 // pred_region
          %p187 = scmp.lt.s32.totalorder %s24, 0
          %s188 = scalar_select %p187, %s24, 0
          %s189 = smul.addr %s188, 2
          %s190 = scalar_lea.vmem %s2, %s189
        $region24: #{tpu_custom_call.1} parent=11 // pred_fallthru
          _
        // Predicated region
        $region25: #{tpu_custom_call.1} parent=11 // pred_check
          %p191 = pneg %p121
        $region26: #{tpu_custom_call.1} parent=11 // pred_check_branch
          %193 = sbr.rel (%p191) target = $region28
        $region27: #{tpu_custom_call.1} parent=11 // pred_region
          %p194 = scmp.lt.s32.totalorder %s24, 0
          %s195 = scalar_select %p194, %s24, 0
          %s196 = smul.addr %s195, 2
          %s197 = scalar_lea.vmem %s3, %s196
        $region28: #{tpu_custom_call.1} parent=11 // pred_fallthru
          _
      $region12: #{tpu_custom_call.1} parent=5 // pred_fallthru
        _
      %p198 = scmp.lt.s32.totalorder %s15, 4
      // Predicated region
      $region29: #{tpu_custom_call.1} parent=5 // pred_check
        %p199 = pneg %p198
      $region30: #{tpu_custom_call.1} parent=5 // pred_check_branch
        %201 = sbr.rel (%p199) target = $region32
      $region31: #{tpu_custom_call.1} parent=5 // pred_region
        _
      $region32: #{tpu_custom_call.1} parent=5 // pred_fallthru
        _
      %p202 = scmp.le.s32.totalorder 1, %s15
      %p203 = scmp.lt.s32.totalorder %s15, 5
      %p204 = pnand %p202, %p203
      %p205 = pneg %p204
      // Predicated region
      $region33: #{tpu_custom_call.1} parent=5 // pred_check
        _
      $region34: #{tpu_custom_call.1} parent=5 // pred_check_branch
        %207 = sbr.rel (%p204) target = $region36
      $region35: #{tpu_custom_call.1} parent=5 // pred_region
        %s208 = ssub.s32 %s15, 1
        // Predicated region
        $region37: #{tpu_custom_call.1} parent=35 // pred_check
          %p209 = pneg %p48
        $region38: #{tpu_custom_call.1} parent=35 // pred_check_branch
          %211 = sbr.rel (%p209) target = $region40
        $region39: #{tpu_custom_call.1} parent=35 // pred_region
          %212 = dma.done [#allocation4], 16
        $region40: #{tpu_custom_call.1} parent=35 // pred_fallthru
          _
        // Predicated region
        $region41: #{tpu_custom_call.1} parent=35 // pred_check
          %p213 = pneg %p69
        $region42: #{tpu_custom_call.1} parent=35 // pred_check_branch
          %215 = sbr.rel (%p213) target = $region44
        $region43: #{tpu_custom_call.1} parent=35 // pred_region
          %216 = dma.done [#allocation5], 16
        $region44: #{tpu_custom_call.1} parent=35 // pred_fallthru
          _
        %217 = sfence
        %p218 = pneg %p48
        %p219 = pneg %p45
        %p220 = pneg %p69
        %p221 = pneg %p66
        %p222 = scmp.lt.s32.totalorder %s24, 0
        %s223 = scalar_select %p222, %s24, 0
        %s224 = smul.addr %s223, 2
        %s225 = scalar_lea.vmem %s2, %s224
        %p226 = pneg %p95
        %p227 = pneg %p92
        %p228 = scmp.lt.s32.totalorder %s24, 0
        %s229 = scalar_select %p228, %s24, 0
        %s230 = smul.addr %s229, 2
        %s231 = scalar_lea.vmem %s3, %s230
        %p232 = pneg %p121
        %p233 = pneg %p118
        %p234 = pneg %p149
        %p235 = pneg %p146
        %s236 = sand.u32 %s136, 1
        %s237 = scalar_lea.sflag [#allocation3], %s236
        %s238 = sand.u32 %s136, 1
        %s239 = smul.addr %s238, 2
        %s240 = scalar_lea.vmem [#allocation7], %s239
        %p241 = scmp.lt.s32.totalorder %s24, 0
        %s242 = scalar_select %p241, %s24, 0
        %s243 = smul.addr %s242, 2
        %s244 = scalar_lea.vmem %s2, %s243
        %p245 = scmp.lt.s32.totalorder %s24, 0
        %s246 = scalar_select %p245, %s24, 0
        %s247 = smul.addr %s246, 2
        %s248 = scalar_lea.vmem %s3, %s247
        %s249 = smul.u32 %s25, 4
        %s250 = sld [smem:[#allocation2 + %s249]]
        %s251 = sadd.s32 %s249, 1
        %s252 = sld [smem:[#allocation2 + %s251]]
        %s253 = sadd.s32 %s249, 2
        %s254 = sld [smem:[#allocation2 + %s253]]
        %s255 = sadd.s32 %s249, 3
        %s256 = sld [smem:[#allocation2 + %s255]]
        %s257 = sld [smem:[#allocation6 + %s249]]
        %s258 = sld [smem:[#allocation6 + %s251]]
        %s259 = sld [smem:[#allocation6 + %s253]]
        %s260 = sld [smem:[#allocation6 + %s255]]
        %v261 = vld [vmem:[%s244] sm:$0x3]
        %v262 = vld [vmem:[%s248] sm:$0x3]
        %v263 = vstv %s250
        %v264 = vsub.f32 %v261, %v263
        %v265 = vstv %s257
        %v266 = vsub.f32 %v262, %v265
        %v267 = vmul.f32 %v264, %v264
        %v268 = vmul.f32 %v266, %v266
        %v269 = vadd.f32 %v267, %v268
        %v270 = vstv %s252
        %v271 = vsub.f32 %v261, %v270
        %v272 = vstv %s258
        %v273 = vsub.f32 %v262, %v272
        %v274 = vmul.f32 %v271, %v271
        %v275 = vmul.f32 %v273, %v273
        %v276 = vadd.f32 %v274, %v275
        %v277 = vmin.f32 %v269, %v276
        %v278 = vstv %s254
        %v279 = vsub.f32 %v261, %v278
        %v280 = vstv %s259
        %v281 = vsub.f32 %v262, %v280
        %v282 = vmul.f32 %v279, %v279
        %v283 = vmul.f32 %v281, %v281
        %v284 = vadd.f32 %v282, %v283
        %v285 = vmin.f32 %v277, %v284
        %v286 = vstv %s256
        %v287 = vsub.f32 %v261, %v286
        %v288 = vstv %s260
        %v289 = vsub.f32 %v262, %v288
        %v290 = vmul.f32 %v287, %v287
        %v291 = vmul.f32 %v289, %v289
        %v292 = vadd.f32 %v290, %v291
        %v293 = vmin.f32 %v285, %v292
        %v294 = vrsqrt.pop %v293
        %v295 = vmul.f32 %v293, %v294
        %vm296 = vcmp.eq.f32.partialorder %v293, inf
        %v297 = vsel %vm296, %v293, %v295
        %vm298 = vcmp.eq.f32.partialorder %v293, 0.0
        %v299 = vand.u32 %v293, 2147483648
        %v300 = vsel %vm298, %v299, %v297
        %v301 = vmul.f32 %v300, 2.0
        %v302 = vtanh.pop %v301
        %303 = vst [vmem:[%s240] sm:$0x3] %v302
        %s304 = sand.u32 %s136, 1
        %s305 = scalar_lea.sflag [#allocation3], %s304
        %s306 = sand.u32 %s136, 1
        %s307 = smul.addr %s306, 2
        %s308 = scalar_lea.vmem [#allocation7], %s307
        // Predicated region
        $region45: #{tpu_custom_call.1} parent=35 // pred_check
          %p309 = pneg %p146
        $region46: #{tpu_custom_call.1} parent=35 // pred_check_branch
          %311 = sbr.rel (%p309) target = $region48
        $region47: #{tpu_custom_call.1} parent=35 // pred_region
          %s313 = ssub.s32 32, 32
          %314 = vsyncadd %s305, %s313
          %s315 = sadd.s32 %s24, %s25
          %s316 = smul.addr %s315, 32
          %s317 = scalar_lea.hbm %s4, %s316
          %s319 = sshll.u32 %s308, 4
          %s320 = int_to_ptr.vmem [resolvable:$true] %s319
          %322 = dma.vmem_to_hbm [thread:$0]  %s320, 32, %s317, %s305
        $region48: #{tpu_custom_call.1} parent=35 // pred_fallthru
          _
      $region36: #{tpu_custom_call.1} parent=5 // pred_fallthru
        _
      %p323 = scmp.le.s32.totalorder 2, %s15
      // Predicated region
      $region49: #{tpu_custom_call.1} parent=5 // pred_check
        %p324 = pneg %p323
      $region50: #{tpu_custom_call.1} parent=5 // pred_check_branch
        %326 = sbr.rel (%p324) target = $region52
      $region51: #{tpu_custom_call.1} parent=5 // pred_region
        %s327 = ssub.s32 %s15, 2
        // Predicated region
        $region53: #{tpu_custom_call.1} parent=51 // pred_check
          %p328 = pneg %p152
        $region54: #{tpu_custom_call.1} parent=51 // pred_check_branch
          %330 = sbr.rel (%p328) target = $region56
        $region55: #{tpu_custom_call.1} parent=51 // pred_region
          %s331 = sand.u32 %s137, 1
          %s332 = scalar_lea.sflag [#allocation3], %s331
          %s333 = sand.u32 %s137, 1
          %s334 = smul.addr %s333, 2
          %s335 = scalar_lea.vmem [#allocation7], %s334
          %336 = dma.done %s332, 32
        $region56: #{tpu_custom_call.1} parent=51 // pred_fallthru
          _
      $region52: #{tpu_custom_call.1} parent=5 // pred_fallthru
        _
    $region6: #{tpu_custom_call.1} parent=1 // loop_footer
      %s19 = sadd.s32 1, %s15
    $region7: #{tpu_custom_call.1} parent=1 // loop_footer_branch
      %14 = sbr.rel target = $region3
    $region8: #{tpu_custom_call.1} parent=1 // loop_exit
      _
    %337 = vsyncpa [#allocation3], 1
    %s338 = scalar_lea.sflag [#allocation3], 1
    %339 = vsyncpa %s338, 1
    %340 = vsyncpa [#allocation4], 1
    %s341 = scalar_lea.sflag [#allocation4], 1
    %342 = vsyncpa %s341, 1
    %343 = vsyncpa [#allocation5], 1
    %s344 = scalar_lea.sflag [#allocation5], 1
    %345 = vsyncpa %s344, 1

</llo_original>
